<compile_context>
chip_gen: v5e
topology: v5e:2x2
jax: 0.10.0
libtpu: 0.0.40
codegen_flags: <defaults>
</compile_context>

<pallas_src>
import functools

import jax
import jax.numpy as jnp
from jax.experimental import pallas as pl
from jax.experimental.pallas import tpu as pltpu


def _fused_kernel(x_ref, w_ref, b_ref, o_ref, *, channels, hw):
    """One row block of x_flat: (rn, K) with K = channels * hw.

    lin[n, c] = sum_k x[n, k] * w[c, k] + b[c]     (MXU dot, f32 accumulation)
    y[n, c*hw + j] = x[n, c*hw + j] + lin[n, c]    (lane-dense stores)
    """
    rn, K = x_ref.shape
    x = x_ref[...]                                           # (rn, K), input dtype

    # Contract last-vs-last dims so Mosaic never materializes a (K, C) lane-padded
    # transposed weight in VMEM. Weight rows >= channels are zero padding.
    lin = jax.lax.dot_general(
        x, w_ref[...],
        dimension_numbers=(((1,), (1,)), ((), ())),
        preferred_element_type=jnp.float32)                  # (rn, 8) f32

    if hw % 128 == 0:
        # Channel spans are lane-aligned: per-channel unmasked, lane-dense stores.
        for c in range(channels):
            lc = (lin[:, c:c + 1] + b_ref[c]).astype(x.dtype)        # (rn, 1)
            o_ref[:, pl.ds(c * hw, hw)] = x[:, c * hw:(c + 1) * hw] + lc
    else:
        # hw not a multiple of 128 (production 210*280): build a full-width
        # per-(row, channel) bias plane with <= C-1 selects and do ONE unmasked
        # full-block store (no tile-crossing slices, no vst.msk).
        col = jax.lax.broadcasted_iota(jnp.int32, (rn, K), 1)
        plane = jnp.broadcast_to(
            (lin[:, 0:1] + b_ref[0]).astype(x.dtype), (rn, K))
        for c in range(1, channels):
            lc = (lin[:, c:c + 1] + b_ref[c]).astype(x.dtype)
            plane = jnp.where(col >= c * hw, lc, plane)
        o_ref[...] = x + plane


def constant_bias_forward(x, weight, bias, *, target_block_bytes=2 << 20):
    """y[s,b,c,h,w] = x[s,b,c,h,w] + (x.view(S,B,-1) @ weight.T + bias)[s,b,c]."""
    S, B, C, H, W = x.shape
    # TODO(synk): channels > 4 (module default 6) not implemented — the torch forward
    # itself fails to broadcast there, so only the C <= 4 behaviour is meaningful.
    assert C <= 4, "torch forward only broadcasts correctly for channels <= 4"
    HW = H * W
    K = C * HW
    N = S * B
    assert weight.shape == (C, K) and bias.shape == (C,)

    x_flat = x.reshape(N, K)                 # row-major, same order as torch .view (free)
    row_bytes = K * x.dtype.itemsize

    if N % 8 != 0 and N * row_bytes <= target_block_bytes:
        # Small ragged N: a single full-array block (block_shape == array shape is legal).
        n_pad, rn = N, N
    else:
        n_pad = -(-N // 8) * 8               # pad rows to a sublane multiple (never rn=N blowup)
        rn = max(8, min(n_pad, (target_block_bytes // row_bytes) // 8 * 8))
        if n_pad >= 32:
            # Keep >= 4 grid steps: both v7x TensorCores busy + DMA/compute overlap.
            rn = min(rn, max(8, (n_pad // 4) // 8 * 8))
        while n_pad % rn:
            rn -= 8
    if n_pad != N:
        x_flat = jnp.pad(x_flat, ((0, n_pad - N), (0, 0)))
    grid = (n_pad // rn,)

    # Zero-pad weight to 8 rows (== its VMEM sublane padding); lin cols C..7 are 0, unused.
    w_pad = jnp.pad(weight, ((0, 8 - C), (0, 0))) if C < 8 else weight

    # VMEM budget: 2x in-block + 2x out-block (double-buffered) + single-buffered weight
    # + in-kernel f32 intermediates + slack; clamped to v7x's 64 MiB physical VMEM.
    blk_bytes = rn * K * x.dtype.itemsize
    w_bytes = w_pad.shape[0] * K * w_pad.dtype.itemsize
    scratch_bytes = (3 if HW % 128 else 1) * rn * K * 4
    vmem_limit = int(min(4 * blk_bytes + w_bytes + scratch_bytes + (8 << 20), 64 << 20))

    kernel = functools.partial(_fused_kernel, channels=C, hw=HW)

    y_flat = pl.pallas_call(
        kernel,
        out_shape=jax.ShapeDtypeStruct((n_pad, K), x.dtype),
        grid=grid,
        in_specs=[
            pl.BlockSpec((rn, K), lambda i: (i, 0)),                  # x rows, streamed once
            pl.BlockSpec((w_pad.shape[0], K), lambda i: (0, 0),
                         pipeline_mode=pl.Buffered(1)),               # weight: resident, 1 copy
            pl.BlockSpec(memory_space=pltpu.MemorySpace.SMEM),        # bias scalars
        ],
        out_specs=pl.BlockSpec((rn, K), lambda i: (i, 0)),
        compiler_params=pltpu.CompilerParams(
            dimension_semantics=("parallel",),   # shard row blocks across TCs (v7x megacore)
            vmem_limit_bytes=vmem_limit,
        ),
    )(x_flat, w_pad, bias)

    if n_pad != N:
        y_flat = y_flat[:N]
    return y_flat.reshape(S, B, C, H, W)


if __name__ == "__main__":
    key = jax.random.PRNGKey(0)

    def make_case(k, S, B, C, H, W):
        K = C * H * W
        kx, kw, kb = jax.random.split(k, 3)
        x = jax.random.normal(kx, (S, B, C, H, W), dtype=jnp.float32)
        bound = 1.0 / (K ** 0.5)   # nn.Linear default init range (deterministic here)
        w = jax.random.uniform(kw, (C, K), minval=-bound, maxval=bound, dtype=jnp.float32)
        b = jax.random.uniform(kb, (C,), minval=-bound, maxval=bound, dtype=jnp.float32)
        return x, w, b

    def reference(x, w, b):
        S, B, C, H, W = x.shape
        lin = jnp.einsum("sbk,ck->sbc", x.reshape(S, B, -1), w,
                         precision=jax.lax.Precision.HIGHEST) + b
        return x + lin[:, :, :, None, None]

    k1, k2 = jax.random.split(key)
    ok = True

    # Case 1: channels=4, 16x16 spatial, S=B=2 -> N=4 (small ragged N, single block).
    x, w, b = make_case(k1, 2, 2, 4, 16, 16)
    y = jax.block_until_ready(constant_bias_forward(x, w, b))
    ok &= bool(jnp.allclose(y, reference(x, w, b), atol=1e-2, rtol=1e-2))
    ok &= y.shape == x.shape

    # Case 2: S=B=4 -> N=16 with a small block budget -> multi-step "parallel" grid.
    x, w, b = make_case(k2, 4, 4, 4, 16, 16)
    y = jax.block_until_ready(
        constant_bias_forward(x, w, b, target_block_bytes=32 << 10))
    ok &= bool(jnp.allclose(y, reference(x, w, b), atol=1e-2, rtol=1e-2))
    ok &= y.shape == x.shape

    assert ok
    print("KERNEL_OK")
</pallas_src>

<mosaic_0001>
module attributes {stable_mosaic.version = 11 : i64} {
  func.func @_fused_kernel(%arg0: i32, %arg1: memref<4x1024xf32, #tpu.memory_space<vmem>>, %arg2: memref<8x1024xf32, #tpu.memory_space<vmem>>, %arg3: memref<4xf32, #tpu.memory_space<smem>>, %arg4: memref<4x1024xf32, #tpu.memory_space<vmem>>) attributes {dimension_semantics = [#tpu.dimension_semantics<parallel>], iteration_bounds = array<i64: 1>, scalar_prefetch = 0 : i64, scratch_operands = 0 : i64, tpu.core_type = #tpu.core_type<tc>, window_params = [{transform_indices = @transform_0, window_bounds = array<i64: 4, 1024>}, {pipeline_mode = #tpu.pipeline_mode<synchronous>, transform_indices = @transform_1, window_bounds = array<i64: 8, 1024>}, {transform_indices = @transform_2, window_bounds = array<i64: 4>}, {transform_indices = @transform_3, window_bounds = array<i64: 4, 1024>}]} {
    %c0 = arith.constant 0 : index
    %c0_0 = arith.constant 0 : index
    %0 = vector.load %arg1[%c0, %c0_0] : memref<4x1024xf32, #tpu.memory_space<vmem>>, vector<4x1024xf32>
    %c0_1 = arith.constant 0 : index
    %c0_2 = arith.constant 0 : index
    %1 = vector.load %arg2[%c0_1, %c0_2] : memref<8x1024xf32, #tpu.memory_space<vmem>>, vector<8x1024xf32>
    %cst = arith.constant dense<0.000000e+00> : vector<4x8xf32>
    %2 = tpu.matmul %0, %1, %cst {dimension_numbers = #tpu.dot_dimension_numbers<[1], [1], [0], [0], [0, 0, 1, 0], [], []>} : vector<4x1024xf32>, vector<8x1024xf32>, vector<4x8xf32> -> vector<4x8xf32>
    %3 = vector.extract_strided_slice %2 {offsets = [0, 0], sizes = [4, 1], strides = [1, 1]} : vector<4x8xf32> to vector<4x1xf32>
    %c0_3 = arith.constant 0 : index
    %4 = memref.load %arg3[%c0_3] : memref<4xf32, #tpu.memory_space<smem>>
    %5 = vector.broadcast %4 : f32 to vector<4x1xf32>
    %6 = arith.addf %3, %5 : vector<4x1xf32>
    %7 = vector.extract_strided_slice %0 {offsets = [0, 0], sizes = [4, 256], strides = [1, 1]} : vector<4x1024xf32> to vector<4x256xf32>
    %8 = vector.broadcast %6 : vector<4x1xf32> to vector<4x256xf32>
    %9 = arith.addf %7, %8 : vector<4x256xf32>
    %c0_4 = arith.constant 0 : index
    %c0_5 = arith.constant 0 : index
    %10 = vector.load %arg4[%c0_4, %c0_5] : memref<4x1024xf32, #tpu.memory_space<vmem>>, vector<4x256xf32>
    tpu.vector_store %arg4[%c0_4, %c0_5], %9 {strides = array<i32>} : memref<4x1024xf32, #tpu.memory_space<vmem>>, vector<4x256xf32>,
    %11 = vector.extract_strided_slice %2 {offsets = [0, 1], sizes = [4, 1], strides = [1, 1]} : vector<4x8xf32> to vector<4x1xf32>
    %c1 = arith.constant 1 : index
    %12 = memref.load %arg3[%c1] : memref<4xf32, #tpu.memory_space<smem>>
    %13 = vector.broadcast %12 : f32 to vector<4x1xf32>
    %14 = arith.addf %11, %13 : vector<4x1xf32>
    %15 = vector.extract_strided_slice %0 {offsets = [0, 256], sizes = [4, 256], strides = [1, 1]} : vector<4x1024xf32> to vector<4x256xf32>
    %16 = vector.broadcast %14 : vector<4x1xf32> to vector<4x256xf32>
    %17 = arith.addf %15, %16 : vector<4x256xf32>
    %c0_6 = arith.constant 0 : index
    %c256 = arith.constant 256 : index
    %18 = vector.load %arg4[%c0_6, %c256] : memref<4x1024xf32, #tpu.memory_space<vmem>>, vector<4x256xf32>
    tpu.vector_store %arg4[%c0_6, %c256], %17 {strides = array<i32>} : memref<4x1024xf32, #tpu.memory_space<vmem>>, vector<4x256xf32>,
    %19 = vector.extract_strided_slice %2 {offsets = [0, 2], sizes = [4, 1], strides = [1, 1]} : vector<4x8xf32> to vector<4x1xf32>
    %c2 = arith.constant 2 : index
    %20 = memref.load %arg3[%c2] : memref<4xf32, #tpu.memory_space<smem>>
    %21 = vector.broadcast %20 : f32 to vector<4x1xf32>
    %22 = arith.addf %19, %21 : vector<4x1xf32>
    %23 = vector.extract_strided_slice %0 {offsets = [0, 512], sizes = [4, 256], strides = [1, 1]} : vector<4x1024xf32> to vector<4x256xf32>
    %24 = vector.broadcast %22 : vector<4x1xf32> to vector<4x256xf32>
    %25 = arith.addf %23, %24 : vector<4x256xf32>
    %c0_7 = arith.constant 0 : index
    %c512 = arith.constant 512 : index
    %26 = vector.load %arg4[%c0_7, %c512] : memref<4x1024xf32, #tpu.memory_space<vmem>>, vector<4x256xf32>
    tpu.vector_store %arg4[%c0_7, %c512], %25 {strides = array<i32>} : memref<4x1024xf32, #tpu.memory_space<vmem>>, vector<4x256xf32>,
    %27 = vector.extract_strided_slice %2 {offsets = [0, 3], sizes = [4, 1], strides = [1, 1]} : vector<4x8xf32> to vector<4x1xf32>
    %c3 = arith.constant 3 : index
    %28 = memref.load %arg3[%c3] : memref<4xf32, #tpu.memory_space<smem>>
    %29 = vector.broadcast %28 : f32 to vector<4x1xf32>
    %30 = arith.addf %27, %29 : vector<4x1xf32>
    %31 = vector.extract_strided_slice %0 {offsets = [0, 768], sizes = [4, 256], strides = [1, 1]} : vector<4x1024xf32> to vector<4x256xf32>
    %32 = vector.broadcast %30 : vector<4x1xf32> to vector<4x256xf32>
    %33 = arith.addf %31, %32 : vector<4x256xf32>
    %c0_8 = arith.constant 0 : index
    %c768 = arith.constant 768 : index
    %34 = vector.load %arg4[%c0_8, %c768] : memref<4x1024xf32, #tpu.memory_space<vmem>>, vector<4x256xf32>
    tpu.vector_store %arg4[%c0_8, %c768], %33 {strides = array<i32>} : memref<4x1024xf32, #tpu.memory_space<vmem>>, vector<4x256xf32>,
    return
  }
  func.func @transform_0(%arg0: i32) -> (i32, i32) {
    %c0_i32 = arith.constant 0 : i32
    %c0_i32_0 = arith.constant 0 : i32
    return %arg0, %c0_i32 : i32, i32
  }
  func.func @transform_1(%arg0: i32) -> (i32, i32) {
    %c0_i32 = arith.constant 0 : i32
    %c0_i32_0 = arith.constant 0 : i32
    %c0_i32_1 = arith.constant 0 : i32
    return %c0_i32, %c0_i32_0 : i32, i32
  }
  func.func @transform_2(%arg0: i32) -> i32 {
    %c0_i32 = arith.constant 0 : i32
    %c0_i32_0 = arith.constant 0 : i32
    return %c0_i32 : i32
  }
  func.func @transform_3(%arg0: i32) -> (i32, i32) {
    %c0_i32 = arith.constant 0 : i32
    %c0_i32_0 = arith.constant 0 : i32
    return %arg0, %c0_i32 : i32, i32
  }
}

</mosaic_0001>

<llo_original>
// kernel: tpu_custom_call.1
$region0: #{tpu_custom_call.1}
  #allocation0 [shape = 'u32[]', space=smem, size = 0x4, offset = 0x4, fixed_abs, tag = 'smem constant byte address 0x4 - core index']
  #allocation1 [shape = 'u32[72,128]{1,0:T(1,128)}', space=vmem, size = 0x9000, scoped, tag = 'internal scratch']
  %s0 = inlined_call_operand.hbm [shape: f32[4,1024], index: 0, kind: input, shape index: {}]
  %s1 = inlined_call_operand.hbm [shape: f32[8,1024], index: 1, kind: input, shape index: {}]
  %s2 = inlined_call_operand.vmem [shape: f32[4], index: 2, kind: input, shape index: {}]
  %s3 = inlined_call_operand.hbm [shape: f32[4,1024], index: 3, kind: output, shape index: {}]
  %s4 = sld [smem:[#allocation0]]
  $region34: #{tpu_custom_call.1} parent=0
    _
  %s6 = ssub.s32 1, %s4
  %s7 = scalar_select 0, %s6, %s4
  $region1: #{tpu_custom_call.1} parent=0
    #allocation2 [shape = 'u8[16384]{0}', space=vmem, size = 0x4000, scoped, tag = 'input window, operand 0, single buffered']
    #allocation3 [shape = 's32[1]{0}', space=sflag, size = 0x4, scoped, tag = 'scoped memory for tpu_custom_call.1']
    #allocation4 [shape = 's32[1]{0}', space=sflag, size = 0x4, scoped, tag = 'scoped memory for tpu_custom_call.1']
    #allocation5 [shape = 's32[1]{0}', space=sflag, size = 0x4, scoped, tag = 'scoped memory for tpu_custom_call.1']
    #allocation6 [shape = 'u8[32768]{0}', space=vmem, size = 0x8000, scoped, tag = 'input window, operand 1, single buffered']
    #allocation7 [shape = 's32[1]{0}', space=sflag, size = 0x4, scoped, tag = 'scoped memory for tpu_custom_call.1']
    #allocation8 [shape = 'u8[512]{0}', space=smem, size = 0x200, scoped, tag = 'input window, operand 2, single buffered']
    #allocation9 [shape = 'u8[16384]{0}', space=vmem, size = 0x4000, scoped, tag = 'output window, operand 0, single buffered']
    %8 = vsyncpa [#allocation3], 0
    %9 = vsyncpa [#allocation7], 0
    %10 = vsyncpa [#allocation5], 0
    %11 = vsyncpa [#allocation4], 0
    // Predicated region
    $region2: #{tpu_custom_call.1} parent=1 // pred_check
      _
    $region3: #{tpu_custom_call.1} parent=1 // pred_check_branch
      %13 = sbr.rel (0) target = $region5
    $region4: #{tpu_custom_call.1} parent=1 // pred_region
      %15 = vsyncadd [#allocation3], 0
      %s17 = sshll.u32 %s0, 4
      %s18 = int_to_ptr.hbm [resolvable:$true] %s17
      %s19 = sshll.u32 [#allocation2], 4
      %s20 = int_to_ptr.vmem [resolvable:$true] %s19
      %22 = dma.hbm_to_vmem [thread:$0]  %s18, 512, %s20, [#allocation3]
    $region5: #{tpu_custom_call.1} parent=1 // pred_fallthru
      _
    // Predicated region
    $region6: #{tpu_custom_call.1} parent=1 // pred_check
      _
    $region7: #{tpu_custom_call.1} parent=1 // pred_check_branch
      %24 = sbr.rel (0) target = $region9
    $region8: #{tpu_custom_call.1} parent=1 // pred_region
      %26 = vsyncadd [#allocation7], 0
      %s28 = sshll.u32 %s1, 4
      %s29 = int_to_ptr.hbm [resolvable:$true] %s28
      %s30 = sshll.u32 [#allocation6], 4
      %s31 = int_to_ptr.vmem [resolvable:$true] %s30
      %33 = dma.hbm_to_vmem [thread:$0]  %s29, 1024, %s31, [#allocation7]
    $region9: #{tpu_custom_call.1} parent=1 // pred_fallthru
      _
    // Predicated region
    $region10: #{tpu_custom_call.1} parent=1 // pred_check
      _
    $region11: #{tpu_custom_call.1} parent=1 // pred_check_branch
      %35 = sbr.rel (0) target = $region13
    $region12: #{tpu_custom_call.1} parent=1 // pred_region
      %37 = vsyncadd [#allocation5], 0
      %s39 = sshll.u32 %s2, 4
      %s40 = int_to_ptr.vmem [resolvable:$true] %s39
      %42 = dma.vmem_to_smem %s40, 16, [#allocation8], [#allocation5]
    $region13: #{tpu_custom_call.1} parent=1 // pred_fallthru
      _
    // Predicated region
    $region14: #{tpu_custom_call.1} parent=1 // pred_check
      _
    $region15: #{tpu_custom_call.1} parent=1 // pred_check_branch
      %44 = sbr.rel (0) target = $region17
    $region16: #{tpu_custom_call.1} parent=1 // pred_region
      %46 = dma.done [#allocation3], 512
    $region17: #{tpu_custom_call.1} parent=1 // pred_fallthru
      _
    // Predicated region
    $region18: #{tpu_custom_call.1} parent=1 // pred_check
      _
    $region19: #{tpu_custom_call.1} parent=1 // pred_check_branch
      %48 = sbr.rel (0) target = $region21
    $region20: #{tpu_custom_call.1} parent=1 // pred_region
      %50 = dma.done [#allocation7], 1024
    $region21: #{tpu_custom_call.1} parent=1 // pred_fallthru
      _
    // Predicated region
    $region22: #{tpu_custom_call.1} parent=1 // pred_check
      _
    $region23: #{tpu_custom_call.1} parent=1 // pred_check_branch
      %52 = sbr.rel (0) target = $region25
    $region24: #{tpu_custom_call.1} parent=1 // pred_region
      %54 = dma.done [#allocation5], 16
    $region25: #{tpu_custom_call.1} parent=1 // pred_fallthru
      _
    %55 = sfence
    %v56 = vld [vmem:[#allocation2] sm:$0xff]
    %v57 = vld [vmem:[#allocation2 + $0x8] sm:$0xff]
    %v58 = vld [vmem:[#allocation2 + $0x10] sm:$0xff]
    %v59 = vld [vmem:[#allocation2 + $0x18] sm:$0xff]
    %v60 = vld [vmem:[#allocation6] sm:$0xff]
    %v61 = vld [vmem:[#allocation6 + $0x8] sm:$0xff]
    %v62 = vld [vmem:[#allocation6 + $0x10] sm:$0xff]
    %v63 = vld [vmem:[#allocation6 + $0x18] sm:$0xff]
    %v64 = vld [vmem:[#allocation6 + $0x20] sm:$0xff]
    %v65 = vld [vmem:[#allocation6 + $0x28] sm:$0xff]
    %v66 = vld [vmem:[#allocation6 + $0x30] sm:$0xff]
    %v67 = vld [vmem:[#allocation6 + $0x38] sm:$0xff]
    %72 = vst [vmem:[#allocation1] ss:$2 sm:$0xff] %v56
    %s73 = scalar_lea.vmem [#allocation1], 16
    %74 = vst [vmem:[%s73] ss:$2 sm:$0xff] %v57
    %s75 = scalar_lea.vmem [#allocation1], 32
    %76 = vst [vmem:[%s75] ss:$2 sm:$0xff] %v58
    %s77 = scalar_lea.vmem [#allocation1], 48
    %78 = vst [vmem:[%s77] ss:$2 sm:$0xff] %v59
    %v79 = vld.sshfl [vmem:[#allocation1] sm:$0xff pattern:$0x75316420]
    %v80 = vld.sshfl [vmem:[#allocation1 + $0x8] sm:$0xff pattern:$0x75316420]
    %v81 = vld.sshfl [vmem:[#allocation1 + $0x10] sm:$0xff pattern:$0x75316420]
    %v82 = vld.sshfl [vmem:[#allocation1 + $0x18] sm:$0xff pattern:$0x75316420]
    %v83 = vld.sshfl [vmem:[#allocation1 + $0x20] sm:$0xff pattern:$0x75316420]
    %v84 = vld.sshfl [vmem:[#allocation1 + $0x28] sm:$0xff pattern:$0x75316420]
    %v85 = vld.sshfl [vmem:[#allocation1 + $0x30] sm:$0xff pattern:$0x75316420]
    %v86 = vld.sshfl [vmem:[#allocation1 + $0x38] sm:$0xff pattern:$0x75316420]
    %95 = vmatpush.xpose.msra.mxu0 0.0
    %96 = vmatpush.xpose.msra.mxu0 0.0
    %97 = vmatpush.xpose.msra.mxu0 0.0
    %98 = vmatpush.xpose.msra.mxu0 0.0
    %99 = vmatpush.xpose.msra.mxu0 0.0
    %100 = vmatpush.xpose.msra.mxu0 0.0
    %101 = vmatpush.xpose.msra.mxu0 0.0
    %102 = vmatpush.xpose.msra.mxu0 0.0
    %103 = vmatpush.xpose.msra.mxu0 0.0
    %104 = vmatpush.xpose.msra.mxu0 0.0
    %105 = vmatpush.xpose.msra.mxu0 0.0
    %106 = vmatpush.xpose.msra.mxu0 0.0
    %107 = vmatpush.xpose.msra.mxu0 0.0
    %108 = vmatpush.xpose.msra.mxu0 0.0
    %109 = vmatpush.xpose.msra.mxu0 0.0
    %110 = vmatpush.xpose.msra.mxu0 %v60
    %111 = vmatmul.f32.gmra.mxu0 %v79
    %v112 = vpop.f32.mrf.mxu0
    %v113 = vadd.f32 0.0, %v112
    %114 = vdwg.mxu0
    %115 = vmatpush.xpose.msra.mxu0 0.0
    %116 = vmatpush.xpose.msra.mxu0 0.0
    %117 = vmatpush.xpose.msra.mxu0 0.0
    %118 = vmatpush.xpose.msra.mxu0 0.0
    %119 = vmatpush.xpose.msra.mxu0 0.0
    %120 = vmatpush.xpose.msra.mxu0 0.0
    %121 = vmatpush.xpose.msra.mxu0 0.0
    %122 = vmatpush.xpose.msra.mxu0 0.0
    %123 = vmatpush.xpose.msra.mxu0 0.0
    %124 = vmatpush.xpose.msra.mxu0 0.0
    %125 = vmatpush.xpose.msra.mxu0 0.0
    %126 = vmatpush.xpose.msra.mxu0 0.0
    %127 = vmatpush.xpose.msra.mxu0 0.0
    %128 = vmatpush.xpose.msra.mxu0 0.0
    %129 = vmatpush.xpose.msra.mxu0 0.0
    %130 = vmatpush.xpose.msra.mxu0 %v61
    %131 = vmatmul.f32.gmra.mxu0 %v80
    %v132 = vpop.f32.mrf.mxu0
    %v133 = vadd.f32 %v113, %v132
    %134 = vdwg.mxu0
    %135 = vmatpush.xpose.msra.mxu0 0.0
    %136 = vmatpush.xpose.msra.mxu0 0.0
    %137 = vmatpush.xpose.msra.mxu0 0.0
    %138 = vmatpush.xpose.msra.mxu0 0.0
    %139 = vmatpush.xpose.msra.mxu0 0.0
    %140 = vmatpush.xpose.msra.mxu0 0.0
    %141 = vmatpush.xpose.msra.mxu0 0.0
    %142 = vmatpush.xpose.msra.mxu0 0.0
    %143 = vmatpush.xpose.msra.mxu0 0.0
    %144 = vmatpush.xpose.msra.mxu0 0.0
    %145 = vmatpush.xpose.msra.mxu0 0.0
    %146 = vmatpush.xpose.msra.mxu0 0.0
    %147 = vmatpush.xpose.msra.mxu0 0.0
    %148 = vmatpush.xpose.msra.mxu0 0.0
    %149 = vmatpush.xpose.msra.mxu0 0.0
    %150 = vmatpush.xpose.msra.mxu0 %v62
    %151 = vmatmul.f32.gmra.mxu0 %v81
    %v152 = vpop.f32.mrf.mxu0
    %v153 = vadd.f32 %v133, %v152
    %154 = vdwg.mxu0
    %155 = vmatpush.xpose.msra.mxu0 0.0
    %156 = vmatpush.xpose.msra.mxu0 0.0
    %157 = vmatpush.xpose.msra.mxu0 0.0
    %158 = vmatpush.xpose.msra.mxu0 0.0
    %159 = vmatpush.xpose.msra.mxu0 0.0
    %160 = vmatpush.xpose.msra.mxu0 0.0
    %161 = vmatpush.xpose.msra.mxu0 0.0
    %162 = vmatpush.xpose.msra.mxu0 0.0
    %163 = vmatpush.xpose.msra.mxu0 0.0
    %164 = vmatpush.xpose.msra.mxu0 0.0
    %165 = vmatpush.xpose.msra.mxu0 0.0
    %166 = vmatpush.xpose.msra.mxu0 0.0
    %167 = vmatpush.xpose.msra.mxu0 0.0
    %168 = vmatpush.xpose.msra.mxu0 0.0
    %169 = vmatpush.xpose.msra.mxu0 0.0
    %170 = vmatpush.xpose.msra.mxu0 %v63
    %171 = vmatmul.f32.gmra.mxu0 %v82
    %v172 = vpop.f32.mrf.mxu0
    %v173 = vadd.f32 %v153, %v172
    %174 = vdwg.mxu0
    %175 = vmatpush.xpose.msra.mxu0 0.0
    %176 = vmatpush.xpose.msra.mxu0 0.0
    %177 = vmatpush.xpose.msra.mxu0 0.0
    %178 = vmatpush.xpose.msra.mxu0 0.0
    %179 = vmatpush.xpose.msra.mxu0 0.0
    %180 = vmatpush.xpose.msra.mxu0 0.0
    %181 = vmatpush.xpose.msra.mxu0 0.0
    %182 = vmatpush.xpose.msra.mxu0 0.0
    %183 = vmatpush.xpose.msra.mxu0 0.0
    %184 = vmatpush.xpose.msra.mxu0 0.0
    %185 = vmatpush.xpose.msra.mxu0 0.0
    %186 = vmatpush.xpose.msra.mxu0 0.0
    %187 = vmatpush.xpose.msra.mxu0 0.0
    %188 = vmatpush.xpose.msra.mxu0 0.0
    %189 = vmatpush.xpose.msra.mxu0 0.0
    %190 = vmatpush.xpose.msra.mxu0 %v64
    %191 = vmatmul.f32.gmra.mxu0 %v83
    %v192 = vpop.f32.mrf.mxu0
    %v193 = vadd.f32 %v173, %v192
    %194 = vdwg.mxu0
    %195 = vmatpush.xpose.msra.mxu0 0.0
    %196 = vmatpush.xpose.msra.mxu0 0.0
    %197 = vmatpush.xpose.msra.mxu0 0.0
    %198 = vmatpush.xpose.msra.mxu0 0.0
    %199 = vmatpush.xpose.msra.mxu0 0.0
    %200 = vmatpush.xpose.msra.mxu0 0.0
    %201 = vmatpush.xpose.msra.mxu0 0.0
    %202 = vmatpush.xpose.msra.mxu0 0.0
    %203 = vmatpush.xpose.msra.mxu0 0.0
    %204 = vmatpush.xpose.msra.mxu0 0.0
    %205 = vmatpush.xpose.msra.mxu0 0.0
    %206 = vmatpush.xpose.msra.mxu0 0.0
    %207 = vmatpush.xpose.msra.mxu0 0.0
    %208 = vmatpush.xpose.msra.mxu0 0.0
    %209 = vmatpush.xpose.msra.mxu0 0.0
    %210 = vmatpush.xpose.msra.mxu0 %v65
    %211 = vmatmul.f32.gmra.mxu0 %v84
    %v212 = vpop.f32.mrf.mxu0
    %v213 = vadd.f32 %v193, %v212
    %214 = vdwg.mxu0
    %215 = vmatpush.xpose.msra.mxu0 0.0
    %216 = vmatpush.xpose.msra.mxu0 0.0
    %217 = vmatpush.xpose.msra.mxu0 0.0
    %218 = vmatpush.xpose.msra.mxu0 0.0
    %219 = vmatpush.xpose.msra.mxu0 0.0
    %220 = vmatpush.xpose.msra.mxu0 0.0
    %221 = vmatpush.xpose.msra.mxu0 0.0
    %222 = vmatpush.xpose.msra.mxu0 0.0
    %223 = vmatpush.xpose.msra.mxu0 0.0
    %224 = vmatpush.xpose.msra.mxu0 0.0
    %225 = vmatpush.xpose.msra.mxu0 0.0
    %226 = vmatpush.xpose.msra.mxu0 0.0
    %227 = vmatpush.xpose.msra.mxu0 0.0
    %228 = vmatpush.xpose.msra.mxu0 0.0
    %229 = vmatpush.xpose.msra.mxu0 0.0
    %230 = vmatpush.xpose.msra.mxu0 %v66
    %231 = vmatmul.f32.gmra.mxu0 %v85
    %v232 = vpop.f32.mrf.mxu0
    %v233 = vadd.f32 %v213, %v232
    %234 = vdwg.mxu0
    %235 = vmatpush.xpose.msra.mxu0 0.0
    %236 = vmatpush.xpose.msra.mxu0 0.0
    %237 = vmatpush.xpose.msra.mxu0 0.0
    %238 = vmatpush.xpose.msra.mxu0 0.0
    %239 = vmatpush.xpose.msra.mxu0 0.0
    %240 = vmatpush.xpose.msra.mxu0 0.0
    %241 = vmatpush.xpose.msra.mxu0 0.0
    %242 = vmatpush.xpose.msra.mxu0 0.0
    %243 = vmatpush.xpose.msra.mxu0 0.0
    %244 = vmatpush.xpose.msra.mxu0 0.0
    %245 = vmatpush.xpose.msra.mxu0 0.0
    %246 = vmatpush.xpose.msra.mxu0 0.0
    %247 = vmatpush.xpose.msra.mxu0 0.0
    %248 = vmatpush.xpose.msra.mxu0 0.0
    %249 = vmatpush.xpose.msra.mxu0 0.0
    %250 = vmatpush.xpose.msra.mxu0 %v67
    %251 = vmatmul.f32.gmra.mxu0 %v86
    %v252 = vpop.f32.mrf.mxu0
    %v253 = vadd.f32 %v233, %v252
    %254 = vdwg.mxu0
    %s255 = sld [smem:[#allocation8]]
    %v256 = vstv %s255
    %v257 = vadd.f32 %v253, %v256
    %259 = vset.pattern.permute.xlu0 0
    %260 = vperm.xlu0 %259, %v257
    %v261 = vpop.permute.xlu0 %260
    %v263 = vunpack.c.l.s4 839922192
    %v264 = vunpack.c.0.s8 %v263
    %v265 = vperm.slane %v261, %v264
    %v267 = vadd.f32 %v56, %v265
    %268 = vst [vmem:[#allocation9] sm:$0xff] %v267
    %s269 = sld [smem:[#allocation8 + $0x1]]
    %v270 = vstv %s269
    %v271 = vadd.f32 %v253, %v270
    %273 = vset.pattern.permute.xlu0 1
    %274 = vperm.xlu0 %273, %v271
    %v275 = vpop.permute.xlu0 %274
    %v277 = vunpack.c.l.s4 839922192
    %v278 = vunpack.c.0.s8 %v277
    %v279 = vperm.slane %v275, %v278
    %v281 = vadd.f32 %v57, %v279
    %282 = vst [vmem:[#allocation9 + $0x8] sm:$0xff] %v281
    %s283 = sld [smem:[#allocation8 + $0x2]]
    %v284 = vstv %s283
    %v285 = vadd.f32 %v253, %v284
    %287 = vset.pattern.permute.xlu0 2
    %288 = vperm.xlu0 %287, %v285
    %v289 = vpop.permute.xlu0 %288
    %v291 = vunpack.c.l.s4 839922192
    %v292 = vunpack.c.0.s8 %v291
    %v293 = vperm.slane %v289, %v292
    %v295 = vadd.f32 %v58, %v293
    %296 = vst [vmem:[#allocation9 + $0x10] sm:$0xff] %v295
    %s297 = sld [smem:[#allocation8 + $0x3]]
    %v298 = vstv %s297
    %v299 = vadd.f32 %v253, %v298
    %301 = vset.pattern.permute.xlu0 3
    %302 = vperm.xlu0 %301, %v299
    %v303 = vpop.permute.xlu0 %302
    %v305 = vunpack.c.l.s4 839922192
    %v306 = vunpack.c.0.s8 %v305
    %v307 = vperm.slane %v303, %v306
    %v309 = vadd.f32 %v59, %v307
    %310 = vst [vmem:[#allocation9 + $0x18] sm:$0xff] %v309
    // Predicated region
    $region26: #{tpu_custom_call.1} parent=1 // pred_check
      _
    $region27: #{tpu_custom_call.1} parent=1 // pred_check_branch
      %312 = sbr.rel (0) target = $region29
    $region28: #{tpu_custom_call.1} parent=1 // pred_region
      %314 = vsyncadd [#allocation4], 0
      %s316 = sshll.u32 [#allocation9], 4
      %s317 = int_to_ptr.vmem [resolvable:$true] %s316
      %s318 = sshll.u32 %s3, 4
      %s319 = int_to_ptr.hbm [resolvable:$true] %s318
      %321 = dma.vmem_to_hbm [thread:$0]  %s317, 512, %s319, [#allocation4]
    $region29: #{tpu_custom_call.1} parent=1 // pred_fallthru
      _
    // Predicated region
    $region30: #{tpu_custom_call.1} parent=1 // pred_check
      _
    $region31: #{tpu_custom_call.1} parent=1 // pred_check_branch
      %323 = sbr.rel (0) target = $region33
    $region32: #{tpu_custom_call.1} parent=1 // pred_region
      %325 = dma.done [#allocation4], 512
    $region33: #{tpu_custom_call.1} parent=1 // pred_fallthru
      _
    %326 = vsyncpa [#allocation3], 1
    %327 = vsyncpa [#allocation7], 1
    %328 = vsyncpa [#allocation4], 1
    %329 = vsyncpa [#allocation5], 1

</llo_original>
